<compile_context>
chip_gen: v5e
topology: v5e:2x2
jax: 0.10.0
libtpu: 0.0.40
codegen_flags: <defaults>
</compile_context>

<pallas_src>
import jax
import jax.numpy as jnp
from jax.experimental import pallas as pl
from jax.experimental.pallas import tpu as pltpu


def _normalize_kernel(x_ref, o_ref):
    # (x - 0.5) / 0.5 == x * 2 - 1 (exact in floating point); mul-add keeps
    # everything on the VPU and avoids the divide/reciprocal path.
    o_ref[...] = x_ref[...] * 2.0 - 1.0


# Lane width of the flattened slab (multiple of 128, lane-dense stores).
_LANE = 512
# Row tile; multiple of 8/16/32 so any packed dtype's sublane tiling is fine.
_TILE_ROWS = 1024


def normalize(x: jax.Array) -> jax.Array:
    """Elementwise (x - 0.5) / 0.5 via a tiled, lane-dense Pallas TPU kernel."""
    orig_shape = x.shape
    n = x.size
    if n == 0:
        return x

    # Flatten and pad to a multiple of the lane width.
    flat = x.reshape(-1)
    pad = (-n) % _LANE
    if pad:
        flat = jnp.pad(flat, (0, pad))
    rows = flat.size // _LANE
    x2d = flat.reshape(rows, _LANE)

    # Single block for small inputs; otherwise tile rows (Pallas handles a
    # ragged final block since the block dims are (8,128)-aligned).
    tile_rows = rows if rows <= _TILE_ROWS else _TILE_ROWS
    grid = (pl.cdiv(rows, tile_rows),)

    out2d = pl.pallas_call(
        _normalize_kernel,
        out_shape=jax.ShapeDtypeStruct(x2d.shape, x2d.dtype),
        grid_spec=pltpu.PrefetchScalarGridSpec(
            num_scalar_prefetch=0,
            grid=grid,
            in_specs=[pl.BlockSpec((tile_rows, _LANE), lambda i: (i, 0))],
            out_specs=pl.BlockSpec((tile_rows, _LANE), lambda i: (i, 0)),
        ),
        compiler_params=pltpu.CompilerParams(
            dimension_semantics=("parallel",),
        ),
    )(x2d)

    out_flat = out2d.reshape(-1)
    if pad:
        out_flat = out_flat[:n]
    return out_flat.reshape(orig_shape)


if __name__ == "__main__":
    key = jax.random.PRNGKey(0)

    # NCHW input, small shape: batch=2, channels=4, spatial=16x16.
    x = jax.random.uniform(key, (2, 4, 16, 16), dtype=jnp.float32)
    y = jax.block_until_ready(normalize(x))
    y_ref = (x - 0.5) / 0.5
    assert y.shape == x.shape and y.dtype == x.dtype
    assert jnp.allclose(y, y_ref, atol=1e-6, rtol=1e-6)

    # Secondary check: a shape whose element count is not a multiple of the
    # lane width, exercising the pad-and-slice path.
    x2 = jax.random.uniform(jax.random.PRNGKey(1), (3, 5, 7, 11),
                            dtype=jnp.float32)
    y2 = jax.block_until_ready(normalize(x2))
    assert y2.shape == x2.shape and y2.dtype == x2.dtype
    assert jnp.allclose(y2, (x2 - 0.5) / 0.5, atol=1e-6, rtol=1e-6)

    print("KERNEL_OK")
</pallas_src>

<mosaic_0001>
module attributes {stable_mosaic.version = 11 : i64} {
  func.func @_normalize_kernel(%arg0: i32, %arg1: memref<4x512xf32, #tpu.memory_space<vmem>>, %arg2: memref<4x512xf32, #tpu.memory_space<vmem>>) attributes {dimension_semantics = [#tpu.dimension_semantics<parallel>], iteration_bounds = array<i64: 1>, scalar_prefetch = 0 : i64, scratch_operands = 0 : i64, tpu.core_type = #tpu.core_type<tc>, window_params = [{transform_indices = @transform_0, window_bounds = array<i64: 4, 512>}, {transform_indices = @transform_1, window_bounds = array<i64: 4, 512>}]} {
    %c0 = arith.constant 0 : index
    %c0_0 = arith.constant 0 : index
    %0 = vector.load %arg1[%c0, %c0_0] : memref<4x512xf32, #tpu.memory_space<vmem>>, vector<4x512xf32>
    %cst = arith.constant 2.000000e+00 : f32
    %1 = vector.broadcast %cst : f32 to vector<4x512xf32>
    %2 = arith.mulf %0, %1 : vector<4x512xf32>
    %cst_1 = arith.constant 1.000000e+00 : f32
    %3 = vector.broadcast %cst_1 : f32 to vector<4x512xf32>
    %4 = arith.subf %2, %3 : vector<4x512xf32>
    %c0_2 = arith.constant 0 : index
    %c0_3 = arith.constant 0 : index
    %5 = vector.load %arg2[%c0_2, %c0_3] : memref<4x512xf32, #tpu.memory_space<vmem>>, vector<4x512xf32>
    tpu.vector_store %arg2[%c0_2, %c0_3], %4 {strides = array<i32>} : memref<4x512xf32, #tpu.memory_space<vmem>>, vector<4x512xf32>,
    return
  }
  func.func @transform_0(%arg0: i32) -> (i32, i32) {
    %c0_i32 = arith.constant 0 : i32
    %c0_i32_0 = arith.constant 0 : i32
    return %arg0, %c0_i32 : i32, i32
  }
  func.func @transform_1(%arg0: i32) -> (i32, i32) {
    %c0_i32 = arith.constant 0 : i32
    %c0_i32_0 = arith.constant 0 : i32
    return %arg0, %c0_i32 : i32, i32
  }
}

</mosaic_0001>

<llo_original>
// kernel: tpu_custom_call.1
$region0: #{tpu_custom_call.1}
  #allocation0 [shape = 'u32[]', space=smem, size = 0x4, offset = 0x4, fixed_abs, tag = 'smem constant byte address 0x4 - core index']
  #allocation1 [shape = 'u32[72,128]{1,0:T(1,128)}', space=vmem, size = 0x9000, scoped, tag = 'internal scratch']
  %s0 = inlined_call_operand.hbm [shape: f32[4,512], index: 0, kind: input, shape index: {}]
  %s1 = inlined_call_operand.hbm [shape: f32[4,512], index: 1, kind: output, shape index: {}]
  %s2 = sld [smem:[#allocation0]]
  $region18: #{tpu_custom_call.1} parent=0
    _
  %s4 = ssub.s32 1, %s2
  %s5 = scalar_select 0, %s4, %s2
  $region1: #{tpu_custom_call.1} parent=0
    #allocation2 [shape = 'u8[8192]{0}', space=vmem, size = 0x2000, scoped, tag = 'input window, operand 0, single buffered']
    #allocation3 [shape = 's32[1]{0}', space=sflag, size = 0x4, scoped, tag = 'scoped memory for tpu_custom_call.1']
    #allocation4 [shape = 's32[1]{0}', space=sflag, size = 0x4, scoped, tag = 'scoped memory for tpu_custom_call.1']
    #allocation5 [shape = 'u8[8192]{0}', space=vmem, size = 0x2000, scoped, tag = 'output window, operand 0, single buffered']
    %6 = vsyncpa [#allocation3], 0
    %7 = vsyncpa [#allocation4], 0
    // Predicated region
    $region2: #{tpu_custom_call.1} parent=1 // pred_check
      _
    $region3: #{tpu_custom_call.1} parent=1 // pred_check_branch
      %9 = sbr.rel (0) target = $region5
    $region4: #{tpu_custom_call.1} parent=1 // pred_region
      %11 = vsyncadd [#allocation3], 0
      %s13 = sshll.u32 %s0, 4
      %s14 = int_to_ptr.hbm [resolvable:$true] %s13
      %s15 = sshll.u32 [#allocation2], 4
      %s16 = int_to_ptr.vmem [resolvable:$true] %s15
      %18 = dma.hbm_to_vmem [thread:$0]  %s14, 256, %s16, [#allocation3]
    $region5: #{tpu_custom_call.1} parent=1 // pred_fallthru
      _
    // Predicated region
    $region6: #{tpu_custom_call.1} parent=1 // pred_check
      _
    $region7: #{tpu_custom_call.1} parent=1 // pred_check_branch
      %20 = sbr.rel (0) target = $region9
    $region8: #{tpu_custom_call.1} parent=1 // pred_region
      %22 = dma.done [#allocation3], 256
    $region9: #{tpu_custom_call.1} parent=1 // pred_fallthru
      _
    %v23 = vld [vmem:[#allocation2] sm:$0xff]
    %v24 = vld [vmem:[#allocation2 + $0x8] sm:$0xff]
    %v25 = vmul.f32 %v23, 2.0
    %v26 = vmul.f32 %v24, 2.0
    %v27 = vsub.f32 %v25, 1.0
    %v28 = vsub.f32 %v26, 1.0
    %29 = vst [vmem:[#allocation5] sm:$0xff] %v27
    %30 = vst [vmem:[#allocation5 + $0x8] sm:$0xff] %v28
    // Predicated region
    $region10: #{tpu_custom_call.1} parent=1 // pred_check
      _
    $region11: #{tpu_custom_call.1} parent=1 // pred_check_branch
      %32 = sbr.rel (0) target = $region13
    $region12: #{tpu_custom_call.1} parent=1 // pred_region
      %34 = vsyncadd [#allocation4], 0
      %s36 = sshll.u32 [#allocation5], 4
      %s37 = int_to_ptr.vmem [resolvable:$true] %s36
      %s38 = sshll.u32 %s1, 4
      %s39 = int_to_ptr.hbm [resolvable:$true] %s38
      %41 = dma.vmem_to_hbm [thread:$0]  %s37, 256, %s39, [#allocation4]
    $region13: #{tpu_custom_call.1} parent=1 // pred_fallthru
      _
    // Predicated region
    $region14: #{tpu_custom_call.1} parent=1 // pred_check
      _
    $region15: #{tpu_custom_call.1} parent=1 // pred_check_branch
      %43 = sbr.rel (0) target = $region17
    $region16: #{tpu_custom_call.1} parent=1 // pred_region
      %45 = dma.done [#allocation4], 256
    $region17: #{tpu_custom_call.1} parent=1 // pred_fallthru
      _
    %46 = vsyncpa [#allocation3], 1
    %47 = vsyncpa [#allocation4], 1

</llo_original>
